<compile_context>
chip_gen: v7x
topology: tpu7x:2x2x1
jax: 0.10.0
libtpu: 0.0.40
codegen_flags: <defaults>
</compile_context>

<pallas_src>
import math

import jax
import jax.numpy as jnp
from jax.experimental import pallas as pl
from jax.experimental.pallas import tpu as pltpu

BETA = 100.0
_NEG_PAD = -1e30          # survives *BETA in f32 and underflows exp() to 0.0


def soft_argmax_kernel(x_ref, g_ref, o_ref):
    # x_ref: (tm, Np)  g_ref: (4, Np)  o_ref: (tm, 4)
    s = x_ref[...].astype(jnp.float32) * BETA
    m = jnp.max(s, axis=-1, keepdims=True)
    e = jnp.exp(s - m)
    # Single MXU pass: contract the lane (N) axis of e against the lane axis of
    # the (4, Np) grid -> columns [Σe·gx, Σe·gy, Σe·gz, Σe].
    acc = jax.lax.dot_general(
        e, g_ref[...],
        dimension_numbers=(((1,), (1,)), ((), ())),
        preferred_element_type=jnp.float32)
    # Normalize on the tiny (tm, 4) slab; exact divide (cheap, keeps 1e-4 tol).
    o_ref[...] = (acc / acc[:, 3:4]).astype(o_ref.dtype)


def _choose_tm(rows, n_lanes, *, max_tile_bytes=12 << 20):
    """Row tile: multiple of 8, fits the VMEM budget, >=2 grid steps if possible."""
    rows8 = pl.cdiv(rows, 8) * 8
    tm = max(8, (max_tile_bytes // (4 * n_lanes)) // 8 * 8)   # VMEM cap (f32)
    tm = min(tm, rows8)
    # Keep at least 2 grid steps when rows allow so the "parallel" axis can
    # shard across both v7x TensorCores.
    if rows8 >= 16 and tm > rows8 // 2:
        tm = max(8, (rows8 // 2) // 8 * 8)
    return tm


def soft_argmax(x, grids):
    """x: (B, C, D, H, W); grids: anything reshapeable to (N, 3). Returns (B, C, 3)."""
    B, C = x.shape[0], x.shape[1]
    N = math.prod(x.shape[2:])
    rows = B * C

    # Lane-align the softmax / reduction axis.
    Np = pl.cdiv(N, 128) * 128

    xf = x.reshape(rows, N).astype(jnp.float32)
    if Np != N:
        xf = jnp.pad(xf, ((0, 0), (0, Np - N)), constant_values=_NEG_PAD)

    # Lane-dense grid (4, Np): gx, gy, gz, ones (fused softmax denominator).
    gT = grids.reshape(N, 3).astype(jnp.float32).T                    # (3, N)
    g4 = jnp.concatenate([gT, jnp.ones((1, N), jnp.float32)], axis=0)  # (4, N)
    if Np != N:
        g4 = jnp.pad(g4, ((0, 0), (0, Np - N)))   # e == 0 there, values irrelevant

    tm = _choose_tm(rows, Np)
    rows_pad = pl.cdiv(rows, tm) * tm
    if rows_pad != rows:
        xf = jnp.pad(xf, ((0, rows_pad - rows), (0, 0)))   # garbage rows, sliced off

    out = pl.pallas_call(
        soft_argmax_kernel,
        out_shape=jax.ShapeDtypeStruct((rows_pad, 4), jnp.float32),
        grid=(rows_pad // tm,),
        in_specs=[
            pl.BlockSpec((tm, Np), lambda i: (i, 0)),   # tm heatmap rows per step
            pl.BlockSpec((4, Np), lambda i: (0, 0)),    # full grid, reused each step
        ],
        out_specs=pl.BlockSpec((tm, 4), lambda i: (i, 0)),
        compiler_params=pltpu.CompilerParams(
            dimension_semantics=("parallel",),
            vmem_limit_bytes=48 << 20),
    )(xf, g4)

    return out[:rows, :3].reshape(B, C, 3)


def soft_argmax_ref(x, grids):
    B, C = x.shape[0], x.shape[1]
    xf = x.reshape(B, C, -1, 1)
    p = jax.nn.softmax(BETA * xf, axis=2)
    g = grids.reshape(1, 1, -1, 3)
    return jnp.sum(p * g, axis=2)


def _make_grid(D, H, W):
    zs = jnp.arange(D, dtype=jnp.float32)
    ys = jnp.arange(H, dtype=jnp.float32)
    xs = jnp.arange(W, dtype=jnp.float32)
    gz, gy, gx = jnp.meshgrid(zs, ys, xs, indexing="ij")
    return jnp.stack([gx, gy, gz], axis=-1)   # (D, H, W, 3)


if __name__ == "__main__":
    key = jax.random.PRNGKey(0)
    k1, k2 = jax.random.split(key, 2)

    # Case 1: lane-aligned N (= 512), multiple row tiles (rows = 32 -> 2 grid steps).
    B, C, D, H, W = 2, 16, 8, 8, 8
    x1 = jax.random.normal(k1, (B, C, D, H, W), dtype=jnp.float32)
    g1 = _make_grid(D, H, W)
    out1 = jax.block_until_ready(soft_argmax(x1, g1))
    ref1 = soft_argmax_ref(x1, g1)
    assert out1.shape == (B, C, 3), out1.shape
    assert jnp.allclose(out1, ref1, atol=1e-4, rtol=1e-4), (
        float(jnp.max(jnp.abs(out1 - ref1))))

    # Case 2: unaligned N (5*6*7 = 210 -> padded to 256) and rows (3 -> padded to 8).
    B2, C2, D2, H2, W2 = 1, 3, 5, 6, 7
    x2 = jax.random.normal(k2, (B2, C2, D2, H2, W2), dtype=jnp.float32)
    g2 = _make_grid(D2, H2, W2)
    out2 = jax.block_until_ready(soft_argmax(x2, g2))
    ref2 = soft_argmax_ref(x2, g2)
    assert out2.shape == (B2, C2, 3), out2.shape
    assert jnp.allclose(out2, ref2, atol=1e-4, rtol=1e-4), (
        float(jnp.max(jnp.abs(out2 - ref2))))

    print("KERNEL_OK")
</pallas_src>

<mosaic_0001>
module attributes {stable_mosaic.version = 11 : i64} {
  func.func @soft_argmax_kernel(%arg0: i32, %arg1: memref<16x512xf32, #tpu.memory_space<vmem>>, %arg2: memref<4x512xf32, #tpu.memory_space<vmem>>, %arg3: memref<16x4xf32, #tpu.memory_space<vmem>>) attributes {dimension_semantics = [#tpu.dimension_semantics<parallel>], iteration_bounds = array<i64: 2>, scalar_prefetch = 0 : i64, scratch_operands = 0 : i64, tpu.core_type = #tpu.core_type<tc>, window_params = [{transform_indices = @transform_0, window_bounds = array<i64: 16, 512>}, {pipeline_mode = #tpu.pipeline_mode<synchronous>, transform_indices = @transform_1, window_bounds = array<i64: 4, 512>}, {transform_indices = @transform_2, window_bounds = array<i64: 16, 4>}]} {
    %c0 = arith.constant 0 : index
    %c0_0 = arith.constant 0 : index
    %0 = vector.load %arg1[%c0, %c0_0] : memref<16x512xf32, #tpu.memory_space<vmem>>, vector<16x512xf32>
    %cst = arith.constant 1.000000e+02 : f32
    %1 = vector.broadcast %cst : f32 to vector<16x512xf32>
    %2 = arith.mulf %0, %1 : vector<16x512xf32>
    %cst_1 = arith.constant dense<0xFF800000> : vector<16xf32>
    %3 = vector.multi_reduction <maximumf>, %2, %cst_1 [1] : vector<16x512xf32> to vector<16xf32>
    %4 = vector.shape_cast %3 : vector<16xf32> to vector<16x1xf32>
    %5 = vector.broadcast %4 : vector<16x1xf32> to vector<16x512xf32>
    %6 = arith.subf %2, %5 : vector<16x512xf32>
    %7 = math.exp %6 : vector<16x512xf32>
    %c0_2 = arith.constant 0 : index
    %c0_3 = arith.constant 0 : index
    %8 = vector.load %arg2[%c0_2, %c0_3] : memref<4x512xf32, #tpu.memory_space<vmem>>, vector<4x512xf32>
    %cst_4 = arith.constant dense<0.000000e+00> : vector<16x4xf32>
    %9 = tpu.matmul %7, %8, %cst_4 {dimension_numbers = #tpu.dot_dimension_numbers<[1], [1], [0], [0], [0, 0, 1, 0], [], []>} : vector<16x512xf32>, vector<4x512xf32>, vector<16x4xf32> -> vector<16x4xf32>
    %10 = vector.extract_strided_slice %9 {offsets = [0, 3], sizes = [16, 1], strides = [1, 1]} : vector<16x4xf32> to vector<16x1xf32>
    %11 = vector.broadcast %10 : vector<16x1xf32> to vector<16x4xf32>
    %12 = arith.divf %9, %11 : vector<16x4xf32>
    %c0_5 = arith.constant 0 : index
    %c0_6 = arith.constant 0 : index
    %13 = vector.load %arg3[%c0_5, %c0_6] : memref<16x4xf32, #tpu.memory_space<vmem>>, vector<16x4xf32>
    tpu.vector_store %arg3[%c0_5, %c0_6], %12 {strides = array<i32>} : memref<16x4xf32, #tpu.memory_space<vmem>>, vector<16x4xf32>,
    return
  }
  func.func @transform_0(%arg0: i32) -> (i32, i32) {
    %c0_i32 = arith.constant 0 : i32
    %c0_i32_0 = arith.constant 0 : i32
    return %arg0, %c0_i32 : i32, i32
  }
  func.func @transform_1(%arg0: i32) -> (i32, i32) {
    %c0_i32 = arith.constant 0 : i32
    %c0_i32_0 = arith.constant 0 : i32
    %c0_i32_1 = arith.constant 0 : i32
    return %c0_i32, %c0_i32_0 : i32, i32
  }
  func.func @transform_2(%arg0: i32) -> (i32, i32) {
    %c0_i32 = arith.constant 0 : i32
    %c0_i32_0 = arith.constant 0 : i32
    return %arg0, %c0_i32 : i32, i32
  }
}

</mosaic_0001>

<llo_original>
// kernel: tpu_custom_call.1
$region0: #{tpu_custom_call.1}
  #allocation0 [shape = 'u32[]', space=smem, size = 0x4, offset = 0x4, fixed_abs, tag = 'smem constant byte address 0x4 - core index']
  #allocation1 [shape = 'u32[144,128]{1,0:T(1,128)}', space=vmem, size = 0x12000, scoped, tag = 'internal scratch']
  %s0 = inlined_call_operand.hbm [shape: f32[32,512], index: 0, kind: input, shape index: {}]
  %s1 = inlined_call_operand.hbm [shape: f32[4,512], index: 1, kind: input, shape index: {}]
  %s2 = inlined_call_operand.vmem [shape: f32[32,4], index: 2, kind: output, shape index: {}]
  %s3 = sld [smem:[#allocation0]]
  $region49: #{tpu_custom_call.1} parent=0
    _
  %s5 = ssub.s32 1, %s3
  %s6 = scalar_select 0, %s5, %s3
  $region1: #{tpu_custom_call.1} parent=0
    #allocation2 [shape = 'u8[65536]{0}', space=vmem, size = 0x10000, scoped, tag = 'input window, operand 0']
    #allocation3 [shape = 's32[2]{0}', space=sflag, size = 0x8, scoped, tag = 'scoped memory for tpu_custom_call.1']
    #allocation4 [shape = 'u8[8192]{0}', space=vmem, size = 0x2000, scoped, tag = 'input window, operand 1, single buffered']
    #allocation5 [shape = 's32[1]{0}', space=sflag, size = 0x4, scoped, tag = 'scoped memory for tpu_custom_call.1']
    %7 = vsyncpa [#allocation3], 0
    %s8 = scalar_lea.sflag [#allocation3], 1
    %9 = vsyncpa %s8, 0
    %10 = vsyncpa [#allocation5], 0
    loop: start=0, step=1, limit=4
    $region2: #{tpu_custom_call.1} parent=1 // loop_pre_header
      _
    $region3: #{tpu_custom_call.1} parent=1 // loop_header
      %s12 = sphi 0, %s16
      %p13 = scmp.ge.s32.totalorder %s12, 4
      %s22 = sphi 0, %s24
      %s25 = sphi 0, %s22
      %s26 = sphi 0, %s25
      %s42 = sphi 0, %s26
      %s46 = sphi 0, %s46
      %s48 = sphi 0, %s46
      %s49 = sphi 0, %s48
      %s63 = sphi 0, %s49
      %s69 = sphi 0, %s71
      %s72 = sphi 0, %s69
      %s73 = sphi 0, %s72
      %s89 = sphi 0, %s73
    $region4: #{tpu_custom_call.1} parent=1 // loop_header_branch
      %15 = sbr.rel (%p13) target = $region8
    $region5: #{tpu_custom_call.1} parent=1 // loop_body
      %s17 = ssub.s32 %s12, 1
      %s18 = ssub.s32 %s12, 2
      %s19 = sadd.s32 %s12, 1
      %s20 = ssub.s32 %s12, %s19
      %p21 = scmp.eq.s32.totalorder %s20, 0
      %s23 = sadd.s32 %s22, 1
      %s24 = scalar_select %p21, %s22, %s23
      %p27 = pneg %p21
      %p28 = scmp.eq.s32.totalorder %s12, 1
      %p29 = por %p27, %p28
      %p30 = scmp.ne.s32.totalorder %s22, %s25
      %p31 = scmp.eq.s32.totalorder %s12, 0
      %p32 = por %p30, %p31
      %p33 = scmp.ne.s32.totalorder %s22, %s25
      %p34 = scmp.eq.s32.totalorder %s17, 1
      %p35 = por %p33, %p34
      %p36 = scmp.ne.s32.totalorder %s25, %s26
      %p37 = scmp.eq.s32.totalorder %s17, 0
      %p38 = por %p36, %p37
      %p39 = scmp.ne.s32.totalorder %s25, %s26
      %p40 = scmp.eq.s32.totalorder %s18, 1
      %p41 = por %p39, %p40
      %p43 = scmp.ne.s32.totalorder %s26, %s42
      %p44 = scmp.eq.s32.totalorder %s18, 0
      %p45 = por %p43, %p44
      %s47 = sadd.s32 %s46, 1
      %p50 = scmp.eq.s32.totalorder %s12, 1
      %p51 = scmp.ne.s32.totalorder %s46, %s48
      %p52 = scmp.eq.s32.totalorder %s12, 0
      %p53 = por %p51, %p52
      %p54 = scmp.ne.s32.totalorder %s46, %s48
      %p55 = scmp.eq.s32.totalorder %s17, 1
      %p56 = por %p54, %p55
      %p57 = scmp.ne.s32.totalorder %s48, %s49
      %p58 = scmp.eq.s32.totalorder %s17, 0
      %p59 = por %p57, %p58
      %p60 = scmp.ne.s32.totalorder %s48, %s49
      %p61 = scmp.eq.s32.totalorder %s18, 1
      %p62 = por %p60, %p61
      %p64 = scmp.ne.s32.totalorder %s49, %s63
      %p65 = scmp.eq.s32.totalorder %s18, 0
      %p66 = por %p64, %p65
      %s67 = ssub.s32 %s12, %s19
      %p68 = scmp.eq.s32.totalorder %s67, 0
      %s70 = sadd.s32 %s69, 1
      %s71 = scalar_select %p68, %s69, %s70
      %p74 = pneg %p68
      %p75 = scmp.eq.s32.totalorder %s12, 1
      %p76 = por %p74, %p75
      %p77 = scmp.ne.s32.totalorder %s69, %s72
      %p78 = scmp.eq.s32.totalorder %s12, 0
      %p79 = por %p77, %p78
      %p80 = scmp.ne.s32.totalorder %s69, %s72
      %p81 = scmp.eq.s32.totalorder %s17, 1
      %p82 = por %p80, %p81
      %p83 = scmp.ne.s32.totalorder %s72, %s73
      %p84 = scmp.eq.s32.totalorder %s17, 0
      %p85 = por %p83, %p84
      %p86 = scmp.ne.s32.totalorder %s72, %s73
      %p87 = scmp.eq.s32.totalorder %s18, 1
      %p88 = por %p86, %p87
      %p90 = scmp.ne.s32.totalorder %s73, %s89
      %p91 = scmp.eq.s32.totalorder %s18, 0
      %p92 = por %p90, %p91
      %p93 = scmp.le.s32.totalorder 1, %s12
      %p94 = scmp.lt.s32.totalorder %s12, 3
      %p95 = pnand %p93, %p94
      %p96 = pneg %p95
      // Predicated region
      $region9: #{tpu_custom_call.1} parent=5 // pred_check
        _
      $region10: #{tpu_custom_call.1} parent=5 // pred_check_branch
        %98 = sbr.rel (%p95) target = $region12
      $region11: #{tpu_custom_call.1} parent=5 // pred_region
        %s99 = ssub.s32 %s12, 1
        // Predicated region
        $region13: #{tpu_custom_call.1} parent=11 // pred_check
          %p100 = pneg %p59
        $region14: #{tpu_custom_call.1} parent=11 // pred_check_branch
          %102 = sbr.rel (%p100) target = $region16
        $region15: #{tpu_custom_call.1} parent=11 // pred_region
          %s104 = ssub.s32 256, 256
          %105 = vsyncadd [#allocation5], %s104
          %s107 = sshll.u32 [#allocation4], 4
          %s108 = int_to_ptr.vmem [resolvable:$true] %s107
          %110 = dma.hbm_to_vmem [thread:$0]  %s1, 256, %s108, [#allocation5]
        $region16: #{tpu_custom_call.1} parent=11 // pred_fallthru
          _
      $region12: #{tpu_custom_call.1} parent=5 // pred_fallthru
        _
      %p111 = scmp.lt.s32.totalorder %s12, 2
      // Predicated region
      $region17: #{tpu_custom_call.1} parent=5 // pred_check
        %p112 = pneg %p111
      $region18: #{tpu_custom_call.1} parent=5 // pred_check_branch
        %114 = sbr.rel (%p112) target = $region20
      $region19: #{tpu_custom_call.1} parent=5 // pred_region
        // Predicated region
        $region21: #{tpu_custom_call.1} parent=19 // pred_check
          %p115 = pneg %p32
        $region22: #{tpu_custom_call.1} parent=19 // pred_check_branch
          %117 = sbr.rel (%p115) target = $region24
        $region23: #{tpu_custom_call.1} parent=19 // pred_region
          %s118 = sand.u32 %s22, 1
          %s119 = scalar_lea.sflag [#allocation3], %s118
          %s120 = sand.u32 %s22, 1
          %s121 = smul.addr %s120, 64
          %s122 = scalar_lea.vmem [#allocation2], %s121
          %s123 = smul.u32 2, %s12
          %s125 = ssub.s32 1024, 1024
          %126 = vsyncadd %s119, %s125
          %s127 = smul.addr %s123, 4
          %s128 = smul.addr %s127, 128
          %s129 = scalar_lea.hbm %s0, %s128
          %s130 = sshll.u32 %s122, 4
          %s131 = int_to_ptr.vmem [resolvable:$true] %s130
          %136 = dma.hbm_to_vmem [thread:$0]  %s129, 1024, %s131, %s119, 512, 512, 32
        $region24: #{tpu_custom_call.1} parent=19 // pred_fallthru
          _
      $region20: #{tpu_custom_call.1} parent=5 // pred_fallthru
        _
      %p137 = scmp.le.s32.totalorder 1, %s12
      %p138 = scmp.lt.s32.totalorder %s12, 3
      %p139 = pnand %p137, %p138
      %p140 = pneg %p139
      // Predicated region
      $region25: #{tpu_custom_call.1} parent=5 // pred_check
        _
      $region26: #{tpu_custom_call.1} parent=5 // pred_check_branch
        %142 = sbr.rel (%p139) target = $region28
      $region27: #{tpu_custom_call.1} parent=5 // pred_region
        %s143 = ssub.s32 %s12, 1
        %s144 = sand.u32 %s25, 1
        %s145 = scalar_lea.sflag [#allocation3], %s144
        %s146 = sand.u32 %s25, 1
        %s147 = smul.addr %s146, 64
        %s148 = scalar_lea.vmem [#allocation2], %s147
        // Predicated region
        $region29: #{tpu_custom_call.1} parent=27 // pred_check
          %p149 = pneg %p38
        $region30: #{tpu_custom_call.1} parent=27 // pred_check_branch
          %151 = sbr.rel (%p149) target = $region32
        $region31: #{tpu_custom_call.1} parent=27 // pred_region
          %152 = dma.done %s145, 1024
        $region32: #{tpu_custom_call.1} parent=27 // pred_fallthru
          _
        // Predicated region
        $region33: #{tpu_custom_call.1} parent=27 // pred_check
          %p153 = pneg %p59
        $region34: #{tpu_custom_call.1} parent=27 // pred_check_branch
          %155 = sbr.rel (%p153) target = $region36
        $region35: #{tpu_custom_call.1} parent=27 // pred_region
          %156 = dma.done [#allocation5], 256
        $region36: #{tpu_custom_call.1} parent=27 // pred_fallthru
          _
        %s157 = sand.u32 %s25, 1
        %s158 = scalar_lea.sflag [#allocation3], %s157
        %s159 = sand.u32 %s25, 1
        %s160 = smul.addr %s159, 64
        %s161 = scalar_lea.vmem [#allocation2], %s160
        %p162 = pneg %p38
        %p163 = pneg %p35
        %p164 = pneg %p59
        %p165 = pneg %p56
        %p166 = pneg %p85
        %p167 = pneg %p82
        %s168 = smul.u32 2, %s17
        %p169 = scmp.lt.s32.totalorder %s168, 3
        %s170 = scalar_select %p169, %s168, 3
        %s171 = smul.addr %s170, 8
        %s172 = scalar_lea.vmem %s2, %s171
        %s173 = smul.u32 2, %s17
        %s174 = smul.u32 2, %s17
        %p175 = scmp.lt.s32.totalorder %s174, 3
        %s176 = scalar_select %p175, %s174, 3
        %s177 = smul.addr %s176, 8
        %s178 = scalar_lea.vmem %s2, %s177
        %s179 = smul.u32 2, %s17
        %v180 = vld [vmem:[%s148] sm:$0xff]
        %v181 = vld [vmem:[%s148 + $0x8] sm:$0xff]
        %v182 = vld [vmem:[%s148 + $0x10] sm:$0xff]
        %v183 = vld [vmem:[%s148 + $0x18] sm:$0xff]
        %v184 = vld [vmem:[%s148 + $0x20] sm:$0xff]
        %v185 = vld [vmem:[%s148 + $0x28] sm:$0xff]
        %v186 = vld [vmem:[%s148 + $0x30] sm:$0xff]
        %v187 = vld [vmem:[%s148 + $0x38] sm:$0xff]
        %v188 = vmul.f32 %v180, 100.0
        %v189 = vmul.f32 %v181, 100.0
        %v190 = vmul.f32 %v182, 100.0
        %v191 = vmul.f32 %v183, 100.0
        %v192 = vmul.f32 %v184, 100.0
        %v193 = vmul.f32 %v185, 100.0
        %v194 = vmul.f32 %v186, 100.0
        %v195 = vmul.f32 %v187, 100.0
        %v196 = vmax.f32 %v188, %v190
        %v197 = vmax.f32 %v189, %v191
        %v198 = vmax.f32 %v196, %v197
        %199 = vmax.xlane.f32.xlu0 %v198
        %v200 = vpop.xlane.xlu0 %199
        %v201 = vmax.f32 %v192, %v194
        %v202 = vmax.f32 %v193, %v195
        %v203 = vmax.f32 %v201, %v202
        %204 = vmax.xlane.f32.xlu0 %v203
        %v205 = vpop.xlane.xlu0 %204
        %v206 = vsub.f32 %v188, %v200
        %v207 = vsub.f32 %v189, %v200
        %v208 = vsub.f32 %v190, %v200
        %v209 = vsub.f32 %v191, %v200
        %v210 = vsub.f32 %v192, %v205
        %v211 = vsub.f32 %v193, %v205
        %v212 = vsub.f32 %v194, %v205
        %v213 = vsub.f32 %v195, %v205
        %v214 = vmul.f32 %v206, 1.442695
        %v215 = vpow.pop %v214
        %v216 = vmul.f32 %v207, 1.442695
        %v217 = vpow.pop %v216
        %v218 = vmul.f32 %v208, 1.442695
        %v219 = vpow.pop %v218
        %v220 = vmul.f32 %v209, 1.442695
        %v221 = vpow.pop %v220
        %v222 = vmul.f32 %v210, 1.442695
        %v223 = vpow.pop %v222
        %v224 = vmul.f32 %v211, 1.442695
        %v225 = vpow.pop %v224
        %v226 = vmul.f32 %v212, 1.442695
        %v227 = vpow.pop %v226
        %v228 = vmul.f32 %v213, 1.442695
        %v229 = vpow.pop %v228
        %v230 = vld [vmem:[#allocation4] sm:$0xff]
        %v231 = vld [vmem:[#allocation4 + $0x8] sm:$0xff]
        %v234 = vcombine.high %v230, %v230
        %v235 = vcombine.high %v231, %v231
        %238 = vmatprep.subr.mxu0 %v234
        %239 = vmatpush1.xpose.msra.mxu0 %v230
        %240 = vmatprep.subr.mxu0 0.0
        %241 = vmatpush1.xpose.msra.mxu0 0.0
        %242 = vmatprep.subr.mxu0 0.0
        %243 = vmatpush1.xpose.msra.mxu0 0.0
        %244 = vmatprep.subr.mxu0 0.0
        %245 = vmatpush1.xpose.msra.mxu0 0.0
        %246 = vmatprep.subr.mxu0 0.0
        %247 = vmatpush1.xpose.msra.mxu0 0.0
        %248 = vmatprep.subr.mxu0 0.0
        %249 = vmatpush1.xpose.msra.mxu0 0.0
        %250 = vmatprep.subr.mxu0 0.0
        %251 = vmatpush1.xpose.msra.mxu0 0.0
        %252 = vmatprep.subr.mxu0 0.0
        %253 = vmatpush1.xpose.msra.mxu0 0.0
        %254 = vmatprep.subr.mxu0 0.0
        %255 = vmatpush1.xpose.msra.mxu0 0.0
        %256 = vmatprep.subr.mxu0 0.0
        %257 = vmatpush1.xpose.msra.mxu0 0.0
        %258 = vmatprep.subr.mxu0 0.0
        %259 = vmatpush1.xpose.msra.mxu0 0.0
        %260 = vmatprep.subr.mxu0 0.0
        %261 = vmatpush1.xpose.msra.mxu0 0.0
        %262 = vmatprep.subr.mxu0 0.0
        %263 = vmatpush1.xpose.msra.mxu0 0.0
        %264 = vmatprep.subr.mxu0 0.0
        %265 = vmatpush1.xpose.msra.mxu0 0.0
        %266 = vmatprep.subr.mxu0 0.0
        %267 = vmatpush1.xpose.msra.mxu0 0.0
        %268 = vmatprep.subr.mxu0 0.0
        %269 = vmatpush1.xpose.msra.mxu0 0.0
        %270 = vmatprep.subr.mxu0 0.0
        %271 = vmatpush1.xpose.msra.mxu0 0.0
        %272 = vmatprep.subr.mxu0 0.0
        %273 = vmatpush1.xpose.msra.mxu0 0.0
        %274 = vmatprep.subr.mxu0 0.0
        %275 = vmatpush1.xpose.msra.mxu0 0.0
        %276 = vmatprep.subr.mxu0 0.0
        %277 = vmatpush1.xpose.msra.mxu0 0.0
        %278 = vmatprep.subr.mxu0 0.0
        %279 = vmatpush1.xpose.msra.mxu0 0.0
        %280 = vmatprep.subr.mxu0 0.0
        %281 = vmatpush1.xpose.msra.mxu0 0.0
        %282 = vmatprep.subr.mxu0 0.0
        %283 = vmatpush1.xpose.msra.mxu0 0.0
        %284 = vmatprep.subr.mxu0 0.0
        %285 = vmatpush1.xpose.msra.mxu0 0.0
        %286 = vmatprep.subr.mxu0 0.0
        %287 = vmatpush1.xpose.msra.mxu0 0.0
        %288 = vmatprep.subr.mxu0 0.0
        %289 = vmatpush1.xpose.msra.mxu0 0.0
        %290 = vmatprep.subr.mxu0 0.0
        %291 = vmatpush1.xpose.msra.mxu0 0.0
        %292 = vmatprep.subr.mxu0 0.0
        %293 = vmatpush1.xpose.msra.mxu0 0.0
        %294 = vmatprep.subr.mxu0 0.0
        %295 = vmatpush1.xpose.msra.mxu0 0.0
        %296 = vmatprep.subr.mxu0 0.0
        %297 = vmatpush1.xpose.msra.mxu0 0.0
        %298 = vmatprep.subr.mxu0 0.0
        %299 = vmatpush1.xpose.msra.mxu0 0.0
        %300 = vmatprep.subr.mxu0 0.0
        %301 = vmatpush1.xpose.msra.mxu0 0.0
        %302 = vmatprep.mubr.f32.mxu0 %v217
        %303 = vmatmul.mubr.f32.gmra.mrb[0].mxu0 %v215
        %v304 = vpop.f32.mrb[0].mxu0
        %v305 = vadd.f32 0.0, %v304
        %v306 = vpop.f32.mrb[0].mxu0
        %307 = vmatprep.mubr.f32.mxu0 %v225
        %308 = vmatmul.mubr.f32.gmra.mrb[0].mxu0 %v223
        %v309 = vpop.f32.mrb[0].mxu0
        %v310 = vadd.f32 0.0, %v309
        %v311 = vpop.f32.mrb[0].mxu0
        %312 = vdwg.mxu0
        %313 = vmatprep.subr.mxu0 %v235
        %314 = vmatpush1.xpose.msra.mxu0 %v231
        %315 = vmatprep.subr.mxu0 0.0
        %316 = vmatpush1.xpose.msra.mxu0 0.0
        %317 = vmatprep.subr.mxu0 0.0
        %318 = vmatpush1.xpose.msra.mxu0 0.0
        %319 = vmatprep.subr.mxu0 0.0
        %320 = vmatpush1.xpose.msra.mxu0 0.0
        %321 = vmatprep.subr.mxu0 0.0
        %322 = vmatpush1.xpose.msra.mxu0 0.0
        %323 = vmatprep.subr.mxu0 0.0
        %324 = vmatpush1.xpose.msra.mxu0 0.0
        %325 = vmatprep.subr.mxu0 0.0
        %326 = vmatpush1.xpose.msra.mxu0 0.0
        %327 = vmatprep.subr.mxu0 0.0
        %328 = vmatpush1.xpose.msra.mxu0 0.0
        %329 = vmatprep.subr.mxu0 0.0
        %330 = vmatpush1.xpose.msra.mxu0 0.0
        %331 = vmatprep.subr.mxu0 0.0
        %332 = vmatpush1.xpose.msra.mxu0 0.0
        %333 = vmatprep.subr.mxu0 0.0
        %334 = vmatpush1.xpose.msra.mxu0 0.0
        %335 = vmatprep.subr.mxu0 0.0
        %336 = vmatpush1.xpose.msra.mxu0 0.0
        %337 = vmatprep.subr.mxu0 0.0
        %338 = vmatpush1.xpose.msra.mxu0 0.0
        %339 = vmatprep.subr.mxu0 0.0
        %340 = vmatpush1.xpose.msra.mxu0 0.0
        %341 = vmatprep.subr.mxu0 0.0
        %342 = vmatpush1.xpose.msra.mxu0 0.0
        %343 = vmatprep.subr.mxu0 0.0
        %344 = vmatpush1.xpose.msra.mxu0 0.0
        %345 = vmatprep.subr.mxu0 0.0
        %346 = vmatpush1.xpose.msra.mxu0 0.0
        %347 = vmatprep.subr.mxu0 0.0
        %348 = vmatpush1.xpose.msra.mxu0 0.0
        %349 = vmatprep.subr.mxu0 0.0
        %350 = vmatpush1.xpose.msra.mxu0 0.0
        %351 = vmatprep.subr.mxu0 0.0
        %352 = vmatpush1.xpose.msra.mxu0 0.0
        %353 = vmatprep.subr.mxu0 0.0
        %354 = vmatpush1.xpose.msra.mxu0 0.0
        %355 = vmatprep.subr.mxu0 0.0
        %356 = vmatpush1.xpose.msra.mxu0 0.0
        %357 = vmatprep.subr.mxu0 0.0
        %358 = vmatpush1.xpose.msra.mxu0 0.0
        %359 = vmatprep.subr.mxu0 0.0
        %360 = vmatpush1.xpose.msra.mxu0 0.0
        %361 = vmatprep.subr.mxu0 0.0
        %362 = vmatpush1.xpose.msra.mxu0 0.0
        %363 = vmatprep.subr.mxu0 0.0
        %364 = vmatpush1.xpose.msra.mxu0 0.0
        %365 = vmatprep.subr.mxu0 0.0
        %366 = vmatpush1.xpose.msra.mxu0 0.0
        %367 = vmatprep.subr.mxu0 0.0
        %368 = vmatpush1.xpose.msra.mxu0 0.0
        %369 = vmatprep.subr.mxu0 0.0
        %370 = vmatpush1.xpose.msra.mxu0 0.0
        %371 = vmatprep.subr.mxu0 0.0
        %372 = vmatpush1.xpose.msra.mxu0 0.0
        %373 = vmatprep.subr.mxu0 0.0
        %374 = vmatpush1.xpose.msra.mxu0 0.0
        %375 = vmatprep.subr.mxu0 0.0
        %376 = vmatpush1.xpose.msra.mxu0 0.0
        %377 = vmatprep.mubr.f32.mxu0 %v221
        %378 = vmatmul.mubr.f32.gmra.mrb[0].mxu0 %v219
        %v379 = vpop.f32.mrb[0].mxu0
        %v380 = vadd.f32 %v305, %v379
        %v381 = vpop.f32.mrb[0].mxu0
        %382 = vmatprep.mubr.f32.mxu0 %v229
        %383 = vmatmul.mubr.f32.gmra.mrb[0].mxu0 %v227
        %v384 = vpop.f32.mrb[0].mxu0
        %v385 = vadd.f32 %v310, %v384
        %v386 = vpop.f32.mrb[0].mxu0
        %387 = vdwg.mxu0
        %389 = vset.pattern.permute.xlu0 3
        %390 = vperm.xlu0 %389, %v380
        %v391 = vpop.permute.xlu0 %390
        %394 = vset.pattern.permute.xlu0 3
        %395 = vperm.xlu0 %394, %v385
        %v396 = vpop.permute.xlu0 %395
        %v398 = vrcp.pop %v391
        %v399 = vmul.f32 %v380, %v398
        %v400 = vrcp.pop %v396
        %v401 = vmul.f32 %v385, %v400
        %vm402 = vcmask 31744
        %403 = vst.msk [vmem:[%s178] sm:$0xff] %vm402, %v399
        %404 = vst.msk [vmem:[%s178 + $0x8] sm:$0xff] %vm402, %v401
        %s405 = smul.u32 2, %s17
        %p406 = scmp.lt.s32.totalorder %s405, 3
        %s407 = scalar_select %p406, %s405, 3
        %s408 = smul.addr %s407, 8
        %s409 = scalar_lea.vmem %s2, %s408
        // Predicated region
        $region37: #{tpu_custom_call.1} parent=27 // pred_check
          %p410 = pneg %p82
        $region38: #{tpu_custom_call.1} parent=27 // pred_check_branch
          %412 = sbr.rel (%p410) target = $region40
        $region39: #{tpu_custom_call.1} parent=27 // pred_region
          %s413 = smul.u32 2, %s17
        $region40: #{tpu_custom_call.1} parent=27 // pred_fallthru
          _
      $region28: #{tpu_custom_call.1} parent=5 // pred_fallthru
        _
      %p414 = scmp.le.s32.totalorder 2, %s12
      // Predicated region
      $region41: #{tpu_custom_call.1} parent=5 // pred_check
        %p415 = pneg %p414
      $region42: #{tpu_custom_call.1} parent=5 // pred_check_branch
        %417 = sbr.rel (%p415) target = $region44
      $region43: #{tpu_custom_call.1} parent=5 // pred_region
        %s418 = ssub.s32 %s12, 2
        // Predicated region
        $region45: #{tpu_custom_call.1} parent=43 // pred_check
          %p419 = pneg %p88
        $region46: #{tpu_custom_call.1} parent=43 // pred_check_branch
          %421 = sbr.rel (%p419) target = $region48
        $region47: #{tpu_custom_call.1} parent=43 // pred_region
          %s422 = smul.u32 2, %s18
          %p423 = scmp.lt.s32.totalorder %s422, 3
          %s424 = scalar_select %p423, %s422, 3
          %s425 = smul.addr %s424, 8
          %s426 = scalar_lea.vmem %s2, %s425
        $region48: #{tpu_custom_call.1} parent=43 // pred_fallthru
          _
      $region44: #{tpu_custom_call.1} parent=5 // pred_fallthru
        _
    $region6: #{tpu_custom_call.1} parent=1 // loop_footer
      %s16 = sadd.s32 1, %s12
    $region7: #{tpu_custom_call.1} parent=1 // loop_footer_branch
      %11 = sbr.rel target = $region3
    $region8: #{tpu_custom_call.1} parent=1 // loop_exit
      _
    %427 = vsyncpa [#allocation3], 1
    %s428 = scalar_lea.sflag [#allocation3], 1
    %429 = vsyncpa %s428, 1
    %430 = vsyncpa [#allocation5], 1

</llo_original>
